<compile_context>
chip_gen: v5e
topology: v5e:2x2
jax: 0.10.0
libtpu: 0.0.40
codegen_flags: <defaults>
</compile_context>

<pallas_src>
import math
import functools

import jax
import jax.numpy as jnp
from jax.experimental import pallas as pl
from jax.experimental.pallas import tpu as pltpu


def make_sinusoidal_pe(d_model: int, max_len: int = 5000) -> jnp.ndarray:
    """Deterministic sinusoidal PE table [max_len, d_model] (matches PyTorch init)."""
    position = jnp.arange(0, max_len, dtype=jnp.float32)[:, None]            # [L, 1]
    div_term = jnp.exp(
        jnp.arange(0, d_model, 2, dtype=jnp.float32) * (-math.log(10000.0) / d_model)
    )                                                                         # [D/2]
    pe = jnp.zeros((max_len, d_model), dtype=jnp.float32)
    pe = pe.at[:, 0::2].set(jnp.sin(position * div_term))
    pe = pe.at[:, 1::2].set(jnp.cos(position * div_term))
    return pe


# ---------------- eval-mode kernel: y = x + pe ----------------
def _pe_add_kernel(x_ref, pe_ref, o_ref):
    # x_ref: (TB, TC) rows of the flattened [B, S*D] array.
    # pe_ref: (1, TC) positional slice, broadcast across the batch rows.
    o_ref[...] = x_ref[...] + pe_ref[...]


# ---------------- train-mode kernel: y = dropout(x + pe) ----------------
def _pe_add_dropout_kernel(x_ref, pe_ref, u_ref, o_ref, *, p):
    y = x_ref[...] + pe_ref[...]
    keep = u_ref[...] >= jnp.float32(p)             # keep with probability (1 - p)
    scale = jnp.asarray(1.0 / (1.0 - p), dtype=y.dtype)
    o_ref[...] = jnp.where(keep, y * scale, jnp.zeros_like(y)).astype(o_ref.dtype)


def _tile_sizes(B: int, F: int, itemsize: int):
    """Pick (row_tile, col_tile) for the flattened [B, F] layout.

    Column tile is the full F when small (single lane-dense block), otherwise a
    multiple of 128.  Row tile keeps each x block around ~4 MiB and sublane
    aligned when it does not cover the whole batch axis.
    """
    lane = 128
    max_cols = 16384                      # elements per column tile cap
    if F <= max_cols:
        tc = F                            # full dim -> always legal, lane-dense if F % 128 == 0
    else:
        tc = (max_cols // lane) * lane

    target_bytes = 4 * 1024 * 1024        # ~4 MiB per x block (double-buffered -> well under VMEM)
    tb = max(1, target_bytes // max(1, tc * itemsize))
    if tb >= B:
        tb = B                            # full batch dim is always a legal block size
    else:
        tb = max(8, (tb // 8) * 8)        # sublane-aligned partial batch tile
    return tb, tc


def positional_encoding(x, pe, *, dropout_p: float = 0.1,
                        training: bool = False, rng_key=None):
    """x: [B, S, D]; pe: [max_len, D]. Returns [B, S, D] = dropout(x + pe[:S])."""
    B, S, D = x.shape
    F = S * D

    # Lane-dense flattened views; pe cast to x.dtype (avoids in-kernel upcasts).
    x2 = x.reshape(B, F)
    pe2 = pe[:S, :].astype(x.dtype).reshape(1, F)

    tb, tc = _tile_sizes(B, F, jnp.dtype(x.dtype).itemsize)
    grid = (pl.cdiv(B, tb), pl.cdiv(F, tc))

    x_spec = pl.BlockSpec((tb, tc), lambda r, c: (r, c))
    pe_spec = pl.BlockSpec((1, tc), lambda r, c: (0, c))
    out_spec = pl.BlockSpec((tb, tc), lambda r, c: (r, c))
    cparams = pltpu.CompilerParams(
        dimension_semantics=("parallel", "parallel"))

    if (not training) or dropout_p == 0.0:
        out2 = pl.pallas_call(
            _pe_add_kernel,
            out_shape=jax.ShapeDtypeStruct((B, F), x.dtype),
            grid=grid,
            in_specs=[x_spec, pe_spec],
            out_specs=out_spec,
            compiler_params=cparams,
        )(x2, pe2)
        return out2.reshape(B, S, D)

    # Training path: uniform randoms generated with jax.random in the wrapper,
    # compare/mask/scale fused with the PE add inside the kernel.
    if rng_key is None:
        rng_key = jax.random.PRNGKey(0)
    u = jax.random.uniform(rng_key, (B, F), dtype=jnp.float32)

    u_spec = pl.BlockSpec((tb, tc), lambda r, c: (r, c))
    kernel = functools.partial(_pe_add_dropout_kernel, p=float(dropout_p))
    out2 = pl.pallas_call(
        kernel,
        out_shape=jax.ShapeDtypeStruct((B, F), x.dtype),
        grid=grid,
        in_specs=[x_spec, pe_spec, u_spec],
        out_specs=out_spec,
        compiler_params=cparams,
    )(x2, pe2, u)
    return out2.reshape(B, S, D)


if __name__ == "__main__":
    # Shapes implied by the forward: [batch, seq_len, d_model]
    B, S, D = 2, 8, 32
    MAX_LEN = 64  # semantics only need pe[:S]; the full 5000 is not needed here

    key = jax.random.PRNGKey(0)
    kx, kdrop = jax.random.split(key)
    x = jax.random.normal(kx, (B, S, D), dtype=jnp.float32)
    pe = make_sinusoidal_pe(D, MAX_LEN)

    ref = x + pe[:S, :][None, :, :]

    # Eval mode (dropout is identity) — exact match to the reference add.
    out = positional_encoding(x, pe, dropout_p=0.1, training=False)
    out = jax.block_until_ready(out)
    assert out.shape == (B, S, D)
    assert jnp.allclose(out, ref, atol=1e-6), "mismatch vs reference add"

    # Training mode (dropout masking/scaling inside the kernel).
    p = 0.1
    out_tr = positional_encoding(x, pe, dropout_p=p, training=True, rng_key=kdrop)
    out_tr = jax.block_until_ready(out_tr)
    assert out_tr.shape == (B, S, D)
    scaled = ref / (1.0 - p)
    ok = jnp.isclose(out_tr, 0.0, atol=1e-6) | jnp.isclose(out_tr, scaled, atol=1e-5)
    assert bool(ok.all()), "dropout output must be 0 or scaled (x + pe)"

    print("KERNEL_OK")
</pallas_src>

<mosaic_0001>
module attributes {stable_mosaic.version = 11 : i64} {
  func.func @_pe_add_kernel(%arg0: i32, %arg1: i32, %arg2: memref<2x256xf32, #tpu.memory_space<vmem>>, %arg3: memref<1x256xf32, #tpu.memory_space<vmem>>, %arg4: memref<2x256xf32, #tpu.memory_space<vmem>>) attributes {dimension_semantics = [#tpu.dimension_semantics<parallel>, #tpu.dimension_semantics<parallel>], iteration_bounds = array<i64: 1, 1>, scalar_prefetch = 0 : i64, scratch_operands = 0 : i64, tpu.core_type = #tpu.core_type<tc>, window_params = [{transform_indices = @transform_0, window_bounds = array<i64: 2, 256>}, {transform_indices = @transform_1, window_bounds = array<i64: 1, 256>}, {transform_indices = @transform_2, window_bounds = array<i64: 2, 256>}]} {
    %c0 = arith.constant 0 : index
    %c0_0 = arith.constant 0 : index
    %0 = vector.load %arg2[%c0, %c0_0] : memref<2x256xf32, #tpu.memory_space<vmem>>, vector<2x256xf32>
    %c0_1 = arith.constant 0 : index
    %c0_2 = arith.constant 0 : index
    %1 = vector.load %arg3[%c0_1, %c0_2] : memref<1x256xf32, #tpu.memory_space<vmem>>, vector<1x256xf32>
    %2 = vector.broadcast %1 : vector<1x256xf32> to vector<2x256xf32>
    %3 = arith.addf %0, %2 : vector<2x256xf32>
    %c0_3 = arith.constant 0 : index
    %c0_4 = arith.constant 0 : index
    %4 = vector.load %arg4[%c0_3, %c0_4] : memref<2x256xf32, #tpu.memory_space<vmem>>, vector<2x256xf32>
    tpu.vector_store %arg4[%c0_3, %c0_4], %3 {strides = array<i32>} : memref<2x256xf32, #tpu.memory_space<vmem>>, vector<2x256xf32>,
    return
  }
  func.func @transform_0(%arg0: i32, %arg1: i32) -> (i32, i32) {
    %c0_i32 = arith.constant 0 : i32
    return %arg0, %arg1 : i32, i32
  }
  func.func @transform_1(%arg0: i32, %arg1: i32) -> (i32, i32) {
    %c0_i32 = arith.constant 0 : i32
    %c0_i32_0 = arith.constant 0 : i32
    return %c0_i32, %arg1 : i32, i32
  }
  func.func @transform_2(%arg0: i32, %arg1: i32) -> (i32, i32) {
    %c0_i32 = arith.constant 0 : i32
    return %arg0, %arg1 : i32, i32
  }
}

</mosaic_0001>

<llo_original>
// kernel: tpu_custom_call.1
$region0: #{tpu_custom_call.1}
  #allocation0 [shape = 'u32[]', space=smem, size = 0x4, offset = 0x4, fixed_abs, tag = 'smem constant byte address 0x4 - core index']
  #allocation1 [shape = 'u32[72,128]{1,0:T(1,128)}', space=vmem, size = 0x9000, scoped, tag = 'internal scratch']
  %s0 = inlined_call_operand.hbm [shape: f32[2,256], index: 0, kind: input, shape index: {}]
  %s1 = inlined_call_operand.hbm [shape: f32[1,256], index: 1, kind: input, shape index: {}]
  %s2 = inlined_call_operand.hbm [shape: f32[2,256], index: 2, kind: output, shape index: {}]
  %s3 = sld [smem:[#allocation0]]
  $region26: #{tpu_custom_call.1} parent=0
    _
  %s5 = ssub.s32 1, %s3
  %s6 = scalar_select 0, %s5, %s3
  $region1: #{tpu_custom_call.1} parent=0
    #allocation2 [shape = 'u8[2048]{0}', space=vmem, size = 0x800, scoped, tag = 'input window, operand 0, single buffered']
    #allocation3 [shape = 's32[1]{0}', space=sflag, size = 0x4, scoped, tag = 'scoped memory for tpu_custom_call.1']
    #allocation4 [shape = 's32[1]{0}', space=sflag, size = 0x4, scoped, tag = 'scoped memory for tpu_custom_call.1']
    #allocation5 [shape = 'u8[1024]{0}', space=vmem, size = 0x400, scoped, tag = 'input window, operand 1, single buffered']
    #allocation6 [shape = 's32[1]{0}', space=sflag, size = 0x4, scoped, tag = 'scoped memory for tpu_custom_call.1']
    #allocation7 [shape = 'u8[2048]{0}', space=vmem, size = 0x800, scoped, tag = 'output window, operand 0, single buffered']
    %7 = vsyncpa [#allocation3], 0
    %8 = vsyncpa [#allocation6], 0
    %9 = vsyncpa [#allocation4], 0
    // Predicated region
    $region2: #{tpu_custom_call.1} parent=1 // pred_check
      _
    $region3: #{tpu_custom_call.1} parent=1 // pred_check_branch
      %11 = sbr.rel (0) target = $region5
    $region4: #{tpu_custom_call.1} parent=1 // pred_region
      %13 = vsyncadd [#allocation3], 0
      %s15 = sshll.u32 %s0, 4
      %s16 = int_to_ptr.hbm [resolvable:$true] %s15
      %s17 = sshll.u32 [#allocation2], 4
      %s18 = int_to_ptr.vmem [resolvable:$true] %s17
      %20 = dma.hbm_to_vmem [thread:$0]  %s16, 64, %s18, [#allocation3]
    $region5: #{tpu_custom_call.1} parent=1 // pred_fallthru
      _
    // Predicated region
    $region6: #{tpu_custom_call.1} parent=1 // pred_check
      _
    $region7: #{tpu_custom_call.1} parent=1 // pred_check_branch
      %22 = sbr.rel (0) target = $region9
    $region8: #{tpu_custom_call.1} parent=1 // pred_region
      %24 = vsyncadd [#allocation6], 0
      %s26 = sshll.u32 %s1, 4
      %s27 = int_to_ptr.hbm [resolvable:$true] %s26
      %s28 = sshll.u32 [#allocation5], 4
      %s29 = int_to_ptr.vmem [resolvable:$true] %s28
      %31 = dma.hbm_to_vmem [thread:$0]  %s27, 32, %s29, [#allocation6]
    $region9: #{tpu_custom_call.1} parent=1 // pred_fallthru
      _
    // Predicated region
    $region10: #{tpu_custom_call.1} parent=1 // pred_check
      _
    $region11: #{tpu_custom_call.1} parent=1 // pred_check_branch
      %33 = sbr.rel (0) target = $region13
    $region12: #{tpu_custom_call.1} parent=1 // pred_region
      %35 = dma.done [#allocation3], 64
    $region13: #{tpu_custom_call.1} parent=1 // pred_fallthru
      _
    // Predicated region
    $region14: #{tpu_custom_call.1} parent=1 // pred_check
      _
    $region15: #{tpu_custom_call.1} parent=1 // pred_check_branch
      %37 = sbr.rel (0) target = $region17
    $region16: #{tpu_custom_call.1} parent=1 // pred_region
      %39 = dma.done [#allocation6], 32
    $region17: #{tpu_custom_call.1} parent=1 // pred_fallthru
      _
    %v40 = vld [vmem:[#allocation2] sm:$0xf]
    %v41 = vld [vmem:[#allocation5] sm:$0x3]
    %v43 = vperm.slane %v41, 0
    %v44 = vperm.slane %v41, 1
    %v45 = vrot.slane %v44, 6
    %vm46 = vcmask 1041408
    %v47 = vsel %vm46, %v43, %v45
    %v49 = vadd.f32 %v40, %v47
    %50 = vst [vmem:[#allocation7] sm:$0xf] %v49
    // Predicated region
    $region18: #{tpu_custom_call.1} parent=1 // pred_check
      _
    $region19: #{tpu_custom_call.1} parent=1 // pred_check_branch
      %52 = sbr.rel (0) target = $region21
    $region20: #{tpu_custom_call.1} parent=1 // pred_region
      %54 = vsyncadd [#allocation4], 0
      %s56 = sshll.u32 [#allocation7], 4
      %s57 = int_to_ptr.vmem [resolvable:$true] %s56
      %s58 = sshll.u32 %s2, 4
      %s59 = int_to_ptr.hbm [resolvable:$true] %s58
      %61 = dma.vmem_to_hbm [thread:$0]  %s57, 64, %s59, [#allocation4]
    $region21: #{tpu_custom_call.1} parent=1 // pred_fallthru
      _
    // Predicated region
    $region22: #{tpu_custom_call.1} parent=1 // pred_check
      _
    $region23: #{tpu_custom_call.1} parent=1 // pred_check_branch
      %63 = sbr.rel (0) target = $region25
    $region24: #{tpu_custom_call.1} parent=1 // pred_region
      %65 = dma.done [#allocation4], 64
    $region25: #{tpu_custom_call.1} parent=1 // pred_fallthru
      _
    %66 = vsyncpa [#allocation3], 1
    %67 = vsyncpa [#allocation6], 1
    %68 = vsyncpa [#allocation4], 1

</llo_original>
